<compile_context>
chip_gen: v7x
topology: tpu7x:2x2x1
jax: 0.10.0
libtpu: 0.0.40
codegen_flags: <defaults>
</compile_context>

<pallas_src>
import jax
import jax.numpy as jnp
from jax.experimental import pallas as pl
from jax.experimental.pallas import tpu as pltpu


def _twin_q_kernel(x_ref,
                   w1_1_ref, b1_1_ref, w2_1_ref, b2_1_ref, w3_1_ref, b3_1_ref,
                   w1_2_ref, b1_2_ref, w2_2_ref, b2_2_ref, w3_2_ref, b3_2_ref,
                   o_ref):
    # Shared activation tile, cast once for both heads (bf16 on the MXU,
    # f32 accumulation).
    x_bf = x_ref[...].astype(jnp.bfloat16)

    def head(w1_ref, b1_ref, w2_ref, b2_ref, w3_ref, b3_ref):
        h1 = (jnp.dot(x_bf, w1_ref[...], preferred_element_type=jnp.float32)
              + b1_ref[...])
        h1 = jnp.maximum(h1, 0.0)
        h2 = (jnp.dot(h1.astype(jnp.bfloat16), w2_ref[...],
                      preferred_element_type=jnp.float32)
              + b2_ref[...])
        h2 = jnp.maximum(h2, 0.0)
        # Final (hidden -> 1) layer: VPU multiply + lane reduction (XLU), not an
        # N=1 MXU matmul.  b3 is an SMEM scalar.
        return jnp.sum(h2 * w3_ref[...], axis=-1, keepdims=True) + b3_ref[0, 0]

    q1 = head(w1_1_ref, b1_1_ref, w2_1_ref, b2_1_ref, w3_1_ref, b3_1_ref)
    q2 = head(w1_2_ref, b1_2_ref, w2_2_ref, b2_2_ref, w3_2_ref, b3_2_ref)

    # Single lane-merged writeback instead of two width-1 masked stores.
    o_ref[...] = jnp.concatenate([q1, q2], axis=-1).astype(o_ref.dtype)


def _resident_spec(p):
    # Whole-array block with a constant index_map -> fetched once, stays
    # resident in VMEM across all batch tiles.
    nd = p.ndim
    return pl.BlockSpec(p.shape, lambda i, _nd=nd: (0,) * _nd)


def _smem_scalar_spec():
    # (1,1) scalar biases live in SMEM (no padded (8,128) VMEM tile / DMA).
    return pl.BlockSpec(memory_space=pltpu.MemorySpace.SMEM)


def _head_specs(p):
    w1, b1, w2, b2, w3, b3 = p
    return [_resident_spec(w1), _resident_spec(b1),
            _resident_spec(w2), _resident_spec(b2),
            _resident_spec(w3), _smem_scalar_spec()]


def _round_up(x, m):
    return ((x + m - 1) // m) * m


def critic_forward(params, state, action, *, block_b=1024):
    """Twin-Q forward. Returns (q1, q2), each (B, 1), matching the PyTorch module."""
    q1_p, q2_p = params
    B = state.shape[0]

    # torch.cat([state, action], 1) done once in the wrapper: negligible HBM
    # traffic, and it lets the first layer be a single K=(s+a) dot per head.
    x = jnp.concatenate([state, action], axis=1)
    sa = x.shape[1]

    # Batch tile: big enough to amortize per-step overhead, but split so the
    # grid has >= 2 steps when possible (keeps both v7x TensorCores busy).
    half = _round_up(pl.cdiv(B, 2), 16)     # multiple of 16 (bf16 sublane tile)
    TB = min(block_b, half)
    if TB >= B:                             # tiny batch -> single full block
        TB = B
    nb = pl.cdiv(B, TB)

    out = pl.pallas_call(
        _twin_q_kernel,
        out_shape=jax.ShapeDtypeStruct((B, 2), jnp.float32),
        grid=(nb,),
        in_specs=[
            pl.BlockSpec((TB, sa), lambda i: (i, 0)),
            *_head_specs(q1_p),
            *_head_specs(q2_p),
        ],
        out_specs=pl.BlockSpec((TB, 2), lambda i: (i, 0)),
        compiler_params=pltpu.CompilerParams(
            dimension_semantics=("parallel",),
            vmem_limit_bytes=32 * 1024 * 1024),
    )(x, *q1_p, *q2_p)

    return out[:, 0:1], out[:, 1:2]


def _init_linear(key, in_dim, out_dim):
    # Mimics PyTorch's default U(-1/sqrt(in), 1/sqrt(in)) init.
    kw, kb = jax.random.split(key)
    bound = 1.0 / float(in_dim) ** 0.5
    w = jax.random.uniform(kw, (in_dim, out_dim), jnp.float32, -bound, bound)
    b = jax.random.uniform(kb, (1, out_dim), jnp.float32, -bound, bound)
    return w, b


def _make_head_params(keys, state_dim, action_dim, hidden_dim):
    w1, b1 = _init_linear(keys[0], state_dim + action_dim, hidden_dim)
    w2, b2 = _init_linear(keys[1], hidden_dim, hidden_dim)
    w3, b3 = _init_linear(keys[2], hidden_dim, 1)
    # Matmul weights stored in bf16 (MXU inputs / halved weight DMA); biases and
    # the tiny (1, hidden) final-layer row stay f32 for the f32 accumulators.
    return (w1.astype(jnp.bfloat16), b1,
            w2.astype(jnp.bfloat16), b2,
            w3.T, b3)


def make_critic_params(key, state_dim, action_dim, hidden_dim):
    keys = jax.random.split(key, 6)
    q1 = _make_head_params(keys[0:3], state_dim, action_dim, hidden_dim)
    q2 = _make_head_params(keys[3:6], state_dim, action_dim, hidden_dim)
    return q1, q2


def _ref_head(x, p):
    # Pure-JAX reference replicating the kernel's bf16-in / f32-accumulate math
    # (PyTorch-equivalent structure: Linear-ReLU-Linear-ReLU-Linear).
    w1, b1, w2, b2, w3_row, b3 = p
    h1 = jnp.maximum(
        jnp.dot(x.astype(jnp.bfloat16), w1, preferred_element_type=jnp.float32) + b1, 0.0)
    h2 = jnp.maximum(
        jnp.dot(h1.astype(jnp.bfloat16), w2, preferred_element_type=jnp.float32) + b2, 0.0)
    return jnp.sum(h2 * w3_row, axis=-1, keepdims=True) + b3


if __name__ == "__main__":
    # Small shapes consistent with the module (hidden_dim matches the default).
    B, state_dim, action_dim, hidden_dim = 8, 6, 2, 256

    key = jax.random.PRNGKey(0)
    k_state, k_action, k_params = jax.random.split(key, 3)
    state = jax.random.normal(k_state, (B, state_dim), jnp.float32)
    action = jax.random.normal(k_action, (B, action_dim), jnp.float32)

    params = make_critic_params(k_params, state_dim, action_dim, hidden_dim)

    q1, q2 = jax.jit(critic_forward)(params, state, action)
    q1 = jax.block_until_ready(q1)
    q2 = jax.block_until_ready(q2)

    # Pure-JAX reference check (same bf16 cast pattern as the kernel).
    x = jnp.concatenate([state, action], axis=1)
    q1_ref = _ref_head(x, params[0])
    q2_ref = _ref_head(x, params[1])
    assert q1.shape == (B, 1) and q2.shape == (B, 1)
    assert jnp.allclose(q1, q1_ref, atol=1e-2, rtol=1e-2)
    assert jnp.allclose(q2, q2_ref, atol=1e-2, rtol=1e-2)

    print("KERNEL_OK")
</pallas_src>

<mosaic_0001>
module attributes {stable_mosaic.version = 11 : i64} {
  func.func @_twin_q_kernel(%arg0: i32, %arg1: memref<8x8xf32, #tpu.memory_space<vmem>>, %arg2: memref<8x256xbf16, #tpu.memory_space<vmem>>, %arg3: memref<1x256xf32, #tpu.memory_space<vmem>>, %arg4: memref<256x256xbf16, #tpu.memory_space<vmem>>, %arg5: memref<1x256xf32, #tpu.memory_space<vmem>>, %arg6: memref<1x256xf32, #tpu.memory_space<vmem>>, %arg7: memref<1x1xf32, #tpu.memory_space<smem>>, %arg8: memref<8x256xbf16, #tpu.memory_space<vmem>>, %arg9: memref<1x256xf32, #tpu.memory_space<vmem>>, %arg10: memref<256x256xbf16, #tpu.memory_space<vmem>>, %arg11: memref<1x256xf32, #tpu.memory_space<vmem>>, %arg12: memref<1x256xf32, #tpu.memory_space<vmem>>, %arg13: memref<1x1xf32, #tpu.memory_space<smem>>, %arg14: memref<8x2xf32, #tpu.memory_space<vmem>>) attributes {dimension_semantics = [#tpu.dimension_semantics<parallel>], iteration_bounds = array<i64: 1>, scalar_prefetch = 0 : i64, scratch_operands = 0 : i64, tpu.core_type = #tpu.core_type<tc>, window_params = [{transform_indices = @transform_0, window_bounds = array<i64: 8, 8>}, {pipeline_mode = #tpu.pipeline_mode<synchronous>, transform_indices = @transform_1, window_bounds = array<i64: 8, 256>}, {pipeline_mode = #tpu.pipeline_mode<synchronous>, transform_indices = @transform_2, window_bounds = array<i64: 1, 256>}, {pipeline_mode = #tpu.pipeline_mode<synchronous>, transform_indices = @transform_3, window_bounds = array<i64: 256, 256>}, {pipeline_mode = #tpu.pipeline_mode<synchronous>, transform_indices = @transform_4, window_bounds = array<i64: 1, 256>}, {pipeline_mode = #tpu.pipeline_mode<synchronous>, transform_indices = @transform_5, window_bounds = array<i64: 1, 256>}, {transform_indices = @transform_6, window_bounds = array<i64: 1, 1>}, {pipeline_mode = #tpu.pipeline_mode<synchronous>, transform_indices = @transform_7, window_bounds = array<i64: 8, 256>}, {pipeline_mode = #tpu.pipeline_mode<synchronous>, transform_indices = @transform_8, window_bounds = array<i64: 1, 256>}, {pipeline_mode = #tpu.pipeline_mode<synchronous>, transform_indices = @transform_9, window_bounds = array<i64: 256, 256>}, {pipeline_mode = #tpu.pipeline_mode<synchronous>, transform_indices = @transform_10, window_bounds = array<i64: 1, 256>}, {pipeline_mode = #tpu.pipeline_mode<synchronous>, transform_indices = @transform_11, window_bounds = array<i64: 1, 256>}, {transform_indices = @transform_12, window_bounds = array<i64: 1, 1>}, {transform_indices = @transform_13, window_bounds = array<i64: 8, 2>}]} {
    %c0 = arith.constant 0 : index
    %c0_0 = arith.constant 0 : index
    %0 = vector.load %arg1[%c0, %c0_0] : memref<8x8xf32, #tpu.memory_space<vmem>>, vector<8x8xf32>
    %1 = arith.truncf %0 : vector<8x8xf32> to vector<8x8xbf16>
    %c0_1 = arith.constant 0 : index
    %c0_2 = arith.constant 0 : index
    %2 = vector.load %arg2[%c0_1, %c0_2] : memref<8x256xbf16, #tpu.memory_space<vmem>>, vector<8x256xbf16>
    %cst = arith.constant dense<0.000000e+00> : vector<8x256xf32>
    %3 = tpu.matmul %1, %2, %cst {dimension_numbers = #tpu.dot_dimension_numbers<[1], [0], [0], [1], [0, 0, 1, 1], [], []>} : vector<8x8xbf16>, vector<8x256xbf16>, vector<8x256xf32> -> vector<8x256xf32>
    %c0_3 = arith.constant 0 : index
    %c0_4 = arith.constant 0 : index
    %4 = vector.load %arg3[%c0_3, %c0_4] : memref<1x256xf32, #tpu.memory_space<vmem>>, vector<1x256xf32>
    %5 = vector.broadcast %4 : vector<1x256xf32> to vector<8x256xf32>
    %6 = arith.addf %3, %5 : vector<8x256xf32>
    %cst_5 = arith.constant 0.000000e+00 : f32
    %7 = vector.broadcast %cst_5 : f32 to vector<8x256xf32>
    %8 = arith.maximumf %6, %7 : vector<8x256xf32>
    %9 = arith.truncf %8 : vector<8x256xf32> to vector<8x256xbf16>
    %c0_6 = arith.constant 0 : index
    %c0_7 = arith.constant 0 : index
    %10 = vector.load %arg4[%c0_6, %c0_7] : memref<256x256xbf16, #tpu.memory_space<vmem>>, vector<256x256xbf16>
    %cst_8 = arith.constant dense<0.000000e+00> : vector<8x256xf32>
    %11 = tpu.matmul %9, %10, %cst_8 {dimension_numbers = #tpu.dot_dimension_numbers<[1], [0], [0], [1], [0, 0, 1, 1], [], []>} : vector<8x256xbf16>, vector<256x256xbf16>, vector<8x256xf32> -> vector<8x256xf32>
    %c0_9 = arith.constant 0 : index
    %c0_10 = arith.constant 0 : index
    %12 = vector.load %arg5[%c0_9, %c0_10] : memref<1x256xf32, #tpu.memory_space<vmem>>, vector<1x256xf32>
    %13 = vector.broadcast %12 : vector<1x256xf32> to vector<8x256xf32>
    %14 = arith.addf %11, %13 : vector<8x256xf32>
    %cst_11 = arith.constant 0.000000e+00 : f32
    %15 = vector.broadcast %cst_11 : f32 to vector<8x256xf32>
    %16 = arith.maximumf %14, %15 : vector<8x256xf32>
    %c0_12 = arith.constant 0 : index
    %c0_13 = arith.constant 0 : index
    %17 = vector.load %arg6[%c0_12, %c0_13] : memref<1x256xf32, #tpu.memory_space<vmem>>, vector<1x256xf32>
    %18 = vector.broadcast %17 : vector<1x256xf32> to vector<8x256xf32>
    %19 = arith.mulf %16, %18 : vector<8x256xf32>
    %cst_14 = arith.constant dense<0.000000e+00> : vector<8xf32>
    %20 = vector.multi_reduction <add>, %19, %cst_14 [1] : vector<8x256xf32> to vector<8xf32>
    %21 = vector.shape_cast %20 : vector<8xf32> to vector<8x1xf32>
    %c0_15 = arith.constant 0 : index
    %c0_16 = arith.constant 0 : index
    %22 = memref.load %arg7[%c0_15, %c0_16] : memref<1x1xf32, #tpu.memory_space<smem>>
    %23 = vector.broadcast %22 : f32 to vector<8x1xf32>
    %24 = arith.addf %21, %23 : vector<8x1xf32>
    %c0_17 = arith.constant 0 : index
    %c0_18 = arith.constant 0 : index
    %25 = vector.load %arg8[%c0_17, %c0_18] : memref<8x256xbf16, #tpu.memory_space<vmem>>, vector<8x256xbf16>
    %cst_19 = arith.constant dense<0.000000e+00> : vector<8x256xf32>
    %26 = tpu.matmul %1, %25, %cst_19 {dimension_numbers = #tpu.dot_dimension_numbers<[1], [0], [0], [1], [0, 0, 1, 1], [], []>} : vector<8x8xbf16>, vector<8x256xbf16>, vector<8x256xf32> -> vector<8x256xf32>
    %c0_20 = arith.constant 0 : index
    %c0_21 = arith.constant 0 : index
    %27 = vector.load %arg9[%c0_20, %c0_21] : memref<1x256xf32, #tpu.memory_space<vmem>>, vector<1x256xf32>
    %28 = vector.broadcast %27 : vector<1x256xf32> to vector<8x256xf32>
    %29 = arith.addf %26, %28 : vector<8x256xf32>
    %cst_22 = arith.constant 0.000000e+00 : f32
    %30 = vector.broadcast %cst_22 : f32 to vector<8x256xf32>
    %31 = arith.maximumf %29, %30 : vector<8x256xf32>
    %32 = arith.truncf %31 : vector<8x256xf32> to vector<8x256xbf16>
    %c0_23 = arith.constant 0 : index
    %c0_24 = arith.constant 0 : index
    %33 = vector.load %arg10[%c0_23, %c0_24] : memref<256x256xbf16, #tpu.memory_space<vmem>>, vector<256x256xbf16>
    %cst_25 = arith.constant dense<0.000000e+00> : vector<8x256xf32>
    %34 = tpu.matmul %32, %33, %cst_25 {dimension_numbers = #tpu.dot_dimension_numbers<[1], [0], [0], [1], [0, 0, 1, 1], [], []>} : vector<8x256xbf16>, vector<256x256xbf16>, vector<8x256xf32> -> vector<8x256xf32>
    %c0_26 = arith.constant 0 : index
    %c0_27 = arith.constant 0 : index
    %35 = vector.load %arg11[%c0_26, %c0_27] : memref<1x256xf32, #tpu.memory_space<vmem>>, vector<1x256xf32>
    %36 = vector.broadcast %35 : vector<1x256xf32> to vector<8x256xf32>
    %37 = arith.addf %34, %36 : vector<8x256xf32>
    %cst_28 = arith.constant 0.000000e+00 : f32
    %38 = vector.broadcast %cst_28 : f32 to vector<8x256xf32>
    %39 = arith.maximumf %37, %38 : vector<8x256xf32>
    %c0_29 = arith.constant 0 : index
    %c0_30 = arith.constant 0 : index
    %40 = vector.load %arg12[%c0_29, %c0_30] : memref<1x256xf32, #tpu.memory_space<vmem>>, vector<1x256xf32>
    %41 = vector.broadcast %40 : vector<1x256xf32> to vector<8x256xf32>
    %42 = arith.mulf %39, %41 : vector<8x256xf32>
    %cst_31 = arith.constant dense<0.000000e+00> : vector<8xf32>
    %43 = vector.multi_reduction <add>, %42, %cst_31 [1] : vector<8x256xf32> to vector<8xf32>
    %44 = vector.shape_cast %43 : vector<8xf32> to vector<8x1xf32>
    %c0_32 = arith.constant 0 : index
    %c0_33 = arith.constant 0 : index
    %45 = memref.load %arg13[%c0_32, %c0_33] : memref<1x1xf32, #tpu.memory_space<smem>>
    %46 = vector.broadcast %45 : f32 to vector<8x1xf32>
    %47 = arith.addf %44, %46 : vector<8x1xf32>
    %48 = tpu.concatenate %24, %47 in 1 : vector<8x1xf32>, vector<8x1xf32> -> vector<8x2xf32>
    %c0_34 = arith.constant 0 : index
    %c0_35 = arith.constant 0 : index
    %49 = vector.load %arg14[%c0_34, %c0_35] : memref<8x2xf32, #tpu.memory_space<vmem>>, vector<8x2xf32>
    tpu.vector_store %arg14[%c0_34, %c0_35], %48 {strides = array<i32>} : memref<8x2xf32, #tpu.memory_space<vmem>>, vector<8x2xf32>,
    return
  }
  func.func @transform_0(%arg0: i32) -> (i32, i32) {
    %c0_i32 = arith.constant 0 : i32
    %c0_i32_0 = arith.constant 0 : i32
    return %arg0, %c0_i32 : i32, i32
  }
  func.func @transform_1(%arg0: i32) -> (i32, i32) {
    %c0_i32 = arith.constant 0 : i32
    %c0_i32_0 = arith.constant 0 : i32
    %c0_i32_1 = arith.constant 0 : i32
    return %c0_i32, %c0_i32_0 : i32, i32
  }
  func.func @transform_2(%arg0: i32) -> (i32, i32) {
    %c0_i32 = arith.constant 0 : i32
    %c0_i32_0 = arith.constant 0 : i32
    %c0_i32_1 = arith.constant 0 : i32
    return %c0_i32, %c0_i32_0 : i32, i32
  }
  func.func @transform_3(%arg0: i32) -> (i32, i32) {
    %c0_i32 = arith.constant 0 : i32
    %c0_i32_0 = arith.constant 0 : i32
    %c0_i32_1 = arith.constant 0 : i32
    return %c0_i32, %c0_i32_0 : i32, i32
  }
  func.func @transform_4(%arg0: i32) -> (i32, i32) {
    %c0_i32 = arith.constant 0 : i32
    %c0_i32_0 = arith.constant 0 : i32
    %c0_i32_1 = arith.constant 0 : i32
    return %c0_i32, %c0_i32_0 : i32, i32
  }
  func.func @transform_5(%arg0: i32) -> (i32, i32) {
    %c0_i32 = arith.constant 0 : i32
    %c0_i32_0 = arith.constant 0 : i32
    %c0_i32_1 = arith.constant 0 : i32
    return %c0_i32, %c0_i32_0 : i32, i32
  }
  func.func @transform_6(%arg0: i32) -> (i32, i32) {
    %c0_i32 = arith.constant 0 : i32
    %c0_i32_0 = arith.constant 0 : i32
    %c0_i32_1 = arith.constant 0 : i32
    return %c0_i32, %c0_i32_0 : i32, i32
  }
  func.func @transform_7(%arg0: i32) -> (i32, i32) {
    %c0_i32 = arith.constant 0 : i32
    %c0_i32_0 = arith.constant 0 : i32
    %c0_i32_1 = arith.constant 0 : i32
    return %c0_i32, %c0_i32_0 : i32, i32
  }
  func.func @transform_8(%arg0: i32) -> (i32, i32) {
    %c0_i32 = arith.constant 0 : i32
    %c0_i32_0 = arith.constant 0 : i32
    %c0_i32_1 = arith.constant 0 : i32
    return %c0_i32, %c0_i32_0 : i32, i32
  }
  func.func @transform_9(%arg0: i32) -> (i32, i32) {
    %c0_i32 = arith.constant 0 : i32
    %c0_i32_0 = arith.constant 0 : i32
    %c0_i32_1 = arith.constant 0 : i32
    return %c0_i32, %c0_i32_0 : i32, i32
  }
  func.func @transform_10(%arg0: i32) -> (i32, i32) {
    %c0_i32 = arith.constant 0 : i32
    %c0_i32_0 = arith.constant 0 : i32
    %c0_i32_1 = arith.constant 0 : i32
    return %c0_i32, %c0_i32_0 : i32, i32
  }
  func.func @transform_11(%arg0: i32) -> (i32, i32) {
    %c0_i32 = arith.constant 0 : i32
    %c0_i32_0 = arith.constant 0 : i32
    %c0_i32_1 = arith.constant 0 : i32
    return %c0_i32, %c0_i32_0 : i32, i32
  }
  func.func @transform_12(%arg0: i32) -> (i32, i32) {
    %c0_i32 = arith.constant 0 : i32
    %c0_i32_0 = arith.constant 0 : i32
    %c0_i32_1 = arith.constant 0 : i32
    return %c0_i32, %c0_i32_0 : i32, i32
  }
  func.func @transform_13(%arg0: i32) -> (i32, i32) {
    %c0_i32 = arith.constant 0 : i32
    %c0_i32_0 = arith.constant 0 : i32
    return %arg0, %c0_i32 : i32, i32
  }
}

</mosaic_0001>

<llo_original>
// kernel: critic_forward.1
$region0: #{critic_forward.1}
  #allocation0 [shape = 'u32[]', space=smem, size = 0x4, offset = 0x4, fixed_abs, tag = 'smem constant byte address 0x4 - core index']
  #allocation1 [shape = 'u32[144,128]{1,0:T(1,128)}', space=vmem, size = 0x12000, scoped, tag = 'internal scratch']
  #allocation2 [shape = 'f32[1,1]{1,0:T(1,128)S(6)}', space=smem, size = 0x200, scoped, tag = 'scoped memory for critic_forward.1']
  #allocation3 [shape = 'f32[1,1]{1,0:T(1,128)S(6)}', space=smem, size = 0x200, scoped, tag = 'scoped memory for critic_forward.1']
  %s0 = inlined_call_operand.vmem [shape: f32[8,8], index: 0, kind: input, shape index: {}]
  %s1 = inlined_call_operand.vmem [shape: bf16[8,256], index: 1, kind: input, shape index: {}]
  %s2 = inlined_call_operand.vmem [shape: f32[1,256], index: 2, kind: input, shape index: {}]
  %s3 = inlined_call_operand.hbm [shape: bf16[256,256], index: 3, kind: input, shape index: {}]
  %s4 = inlined_call_operand.vmem [shape: f32[1,256], index: 4, kind: input, shape index: {}]
  %s5 = inlined_call_operand.vmem [shape: f32[1,256], index: 5, kind: input, shape index: {}]
  %s6 = inlined_call_operand.<no memory space> [shape: f32[1,1], index: 6, kind: input, shape index: {}]
  %s7 = inlined_call_operand.vmem [shape: bf16[8,256], index: 7, kind: input, shape index: {}]
  %s8 = inlined_call_operand.vmem [shape: f32[1,256], index: 8, kind: input, shape index: {}]
  %s9 = inlined_call_operand.hbm [shape: bf16[256,256], index: 9, kind: input, shape index: {}]
  %s10 = inlined_call_operand.vmem [shape: f32[1,256], index: 10, kind: input, shape index: {}]
  %s11 = inlined_call_operand.vmem [shape: f32[1,256], index: 11, kind: input, shape index: {}]
  %s12 = inlined_call_operand.<no memory space> [shape: f32[1,1], index: 12, kind: input, shape index: {}]
  %s13 = inlined_call_operand.vmem [shape: f32[8,2], index: 13, kind: output, shape index: {}]
  %s14 = sld [smem:[#allocation0]]
  $region70: #{critic_forward.1} parent=0
    _
  %s16 = ssub.s32 1, %s14
  %s17 = scalar_select 0, %s16, %s14
  %18 = sst [smem:[#allocation2]] %s6
  %19 = sst [smem:[#allocation3]] %s12
  $region1: #{critic_forward.1} parent=0
    #allocation4 [shape = 'u8[131072]{0}', space=vmem, size = 0x20000, scoped, tag = 'input window, operand 3, single buffered']
    #allocation5 [shape = 's32[1]{0}', space=sflag, size = 0x4, scoped, tag = 'scoped memory for critic_forward.1']
    #allocation6 [shape = 'u8[131072]{0}', space=vmem, size = 0x20000, scoped, tag = 'input window, operand 9, single buffered']
    #allocation7 [shape = 's32[1]{0}', space=sflag, size = 0x4, scoped, tag = 'scoped memory for critic_forward.1']
    %20 = vsyncpa [#allocation5], 0
    %21 = vsyncpa [#allocation7], 0
    // Predicated region
    $region2: #{critic_forward.1} parent=1 // pred_check
      _
    $region3: #{critic_forward.1} parent=1 // pred_check_branch
      %23 = sbr.rel (0) target = $region5
    $region4: #{critic_forward.1} parent=1 // pred_region
      _
    $region5: #{critic_forward.1} parent=1 // pred_fallthru
      _
    // Predicated region
    $region6: #{critic_forward.1} parent=1 // pred_check
      _
    $region7: #{critic_forward.1} parent=1 // pred_check_branch
      %25 = sbr.rel (0) target = $region9
    $region8: #{critic_forward.1} parent=1 // pred_region
      _
    $region9: #{critic_forward.1} parent=1 // pred_fallthru
      _
    // Predicated region
    $region10: #{critic_forward.1} parent=1 // pred_check
      _
    $region11: #{critic_forward.1} parent=1 // pred_check_branch
      %27 = sbr.rel (0) target = $region13
    $region12: #{critic_forward.1} parent=1 // pred_region
      _
    $region13: #{critic_forward.1} parent=1 // pred_fallthru
      _
    // Predicated region
    $region14: #{critic_forward.1} parent=1 // pred_check
      _
    $region15: #{critic_forward.1} parent=1 // pred_check_branch
      %29 = sbr.rel (0) target = $region17
    $region16: #{critic_forward.1} parent=1 // pred_region
      %s31 = ssub.s32 4096, 4096
      %32 = vsyncadd [#allocation5], %s31
      %s33 = sshll.u32 [#allocation4], 4
      %s34 = int_to_ptr.vmem [resolvable:$true] %s33
      %39 = dma.hbm_to_vmem [thread:$0]  %s3, 4096, %s34, [#allocation5], 128, 128, 8
    $region17: #{critic_forward.1} parent=1 // pred_fallthru
      _
    // Predicated region
    $region18: #{critic_forward.1} parent=1 // pred_check
      _
    $region19: #{critic_forward.1} parent=1 // pred_check_branch
      %41 = sbr.rel (0) target = $region21
    $region20: #{critic_forward.1} parent=1 // pred_region
      _
    $region21: #{critic_forward.1} parent=1 // pred_fallthru
      _
    // Predicated region
    $region22: #{critic_forward.1} parent=1 // pred_check
      _
    $region23: #{critic_forward.1} parent=1 // pred_check_branch
      %43 = sbr.rel (0) target = $region25
    $region24: #{critic_forward.1} parent=1 // pred_region
      _
    $region25: #{critic_forward.1} parent=1 // pred_fallthru
      _
    // Predicated region
    $region26: #{critic_forward.1} parent=1 // pred_check
      _
    $region27: #{critic_forward.1} parent=1 // pred_check_branch
      %45 = sbr.rel (0) target = $region29
    $region28: #{critic_forward.1} parent=1 // pred_region
      _
    $region29: #{critic_forward.1} parent=1 // pred_fallthru
      _
    // Predicated region
    $region30: #{critic_forward.1} parent=1 // pred_check
      _
    $region31: #{critic_forward.1} parent=1 // pred_check_branch
      %47 = sbr.rel (0) target = $region33
    $region32: #{critic_forward.1} parent=1 // pred_region
      _
    $region33: #{critic_forward.1} parent=1 // pred_fallthru
      _
    // Predicated region
    $region34: #{critic_forward.1} parent=1 // pred_check
      _
    $region35: #{critic_forward.1} parent=1 // pred_check_branch
      %49 = sbr.rel (0) target = $region37
    $region36: #{critic_forward.1} parent=1 // pred_region
      _
    $region37: #{critic_forward.1} parent=1 // pred_fallthru
      _
    // Predicated region
    $region38: #{critic_forward.1} parent=1 // pred_check
      _
    $region39: #{critic_forward.1} parent=1 // pred_check_branch
      %51 = sbr.rel (0) target = $region41
    $region40: #{critic_forward.1} parent=1 // pred_region
      %s53 = ssub.s32 4096, 4096
      %54 = vsyncadd [#allocation7], %s53
      %s55 = sshll.u32 [#allocation6], 4
      %s56 = int_to_ptr.vmem [resolvable:$true] %s55
      %61 = dma.hbm_to_vmem [thread:$0]  %s9, 4096, %s56, [#allocation7], 128, 128, 8
    $region41: #{critic_forward.1} parent=1 // pred_fallthru
      _
    // Predicated region
    $region42: #{critic_forward.1} parent=1 // pred_check
      _
    $region43: #{critic_forward.1} parent=1 // pred_check_branch
      %63 = sbr.rel (0) target = $region45
    $region44: #{critic_forward.1} parent=1 // pred_region
      _
    $region45: #{critic_forward.1} parent=1 // pred_fallthru
      _
    // Predicated region
    $region46: #{critic_forward.1} parent=1 // pred_check
      _
    $region47: #{critic_forward.1} parent=1 // pred_check_branch
      %65 = sbr.rel (0) target = $region49
    $region48: #{critic_forward.1} parent=1 // pred_region
      _
    $region49: #{critic_forward.1} parent=1 // pred_fallthru
      _
    // Predicated region
    $region50: #{critic_forward.1} parent=1 // pred_check
      _
    $region51: #{critic_forward.1} parent=1 // pred_check_branch
      %67 = sbr.rel (0) target = $region53
    $region52: #{critic_forward.1} parent=1 // pred_region
      _
    $region53: #{critic_forward.1} parent=1 // pred_fallthru
      _
    // Predicated region
    $region54: #{critic_forward.1} parent=1 // pred_check
      _
    $region55: #{critic_forward.1} parent=1 // pred_check_branch
      %69 = sbr.rel (0) target = $region57
    $region56: #{critic_forward.1} parent=1 // pred_region
      %70 = dma.done [#allocation5], 4096
    $region57: #{critic_forward.1} parent=1 // pred_fallthru
      _
    // Predicated region
    $region58: #{critic_forward.1} parent=1 // pred_check
      _
    $region59: #{critic_forward.1} parent=1 // pred_check_branch
      %72 = sbr.rel (0) target = $region61
    $region60: #{critic_forward.1} parent=1 // pred_region
      %73 = dma.done [#allocation7], 4096
    $region61: #{critic_forward.1} parent=1 // pred_fallthru
      _
    %v75 = vld [vmem:[%s0] sm:$0xff]
    %v76 = vpack.c.bf16 %v75, %v75
    %v77 = vld [vmem:[%s1] sm:$0xff]
    %v78 = vld [vmem:[%s2] sm:$0x3]
    %v80 = vlaneseq
    %v81 = vshrl.u32 %v80, 7
    %v82 = vsub.s32 0, %v81
    %v83 = vrot.slane %v78, %v82
    %v84 = vlaneseq
    %v85 = vshrl.u32 %v84, 7
    %v86 = vsub.s32 1, %v85
    %v87 = vrot.slane %v78, %v86
    %v91 = vunpack.c.l.b16 %v77
    %v92 = vunpack.c.h.b16 %v77
    %v93 = vpack.c.b16 %v91, %v91
    %v94 = vpack.c.b16 %v92, %v92
    %vm95 = vcmask 64512
    %v97 = vsel %vm95, %v76, 0
    %vm99 = vcmask 1043456
    %v101 = vsel %vm99, %v93, 0
    %v104 = vsel %vm99, %v94, 0
    %106 = vmatprep.subr.bf16.mxu0 %v104
    %107 = vmatpush1.bf16.msra.mxu0 %v101
    %108 = vmatprep.subr.bf16.mxu0 0
    %109 = vmatpush1.bf16.msra.mxu0 0
    %110 = vmatprep.subr.bf16.mxu0 0
    %111 = vmatpush1.bf16.msra.mxu0 0
    %112 = vmatprep.subr.bf16.mxu0 0
    %113 = vmatpush1.bf16.msra.mxu0 0
    %114 = vmatprep.subr.bf16.mxu0 0
    %115 = vmatpush1.bf16.msra.mxu0 0
    %116 = vmatprep.subr.bf16.mxu0 0
    %117 = vmatpush1.bf16.msra.mxu0 0
    %118 = vmatprep.subr.bf16.mxu0 0
    %119 = vmatpush1.bf16.msra.mxu0 0
    %120 = vmatprep.subr.bf16.mxu0 0
    %121 = vmatpush1.bf16.msra.mxu0 0
    %122 = vmatprep.subr.bf16.mxu0 0
    %123 = vmatpush1.bf16.msra.mxu0 0
    %124 = vmatprep.subr.bf16.mxu0 0
    %125 = vmatpush1.bf16.msra.mxu0 0
    %126 = vmatprep.subr.bf16.mxu0 0
    %127 = vmatpush1.bf16.msra.mxu0 0
    %128 = vmatprep.subr.bf16.mxu0 0
    %129 = vmatpush1.bf16.msra.mxu0 0
    %130 = vmatprep.subr.bf16.mxu0 0
    %131 = vmatpush1.bf16.msra.mxu0 0
    %132 = vmatprep.subr.bf16.mxu0 0
    %133 = vmatpush1.bf16.msra.mxu0 0
    %134 = vmatprep.subr.bf16.mxu0 0
    %135 = vmatpush1.bf16.msra.mxu0 0
    %136 = vmatprep.subr.bf16.mxu0 0
    %137 = vmatpush1.bf16.msra.mxu0 0
    %138 = vmatprep.mubr.bf16.mxu0 0
    %139 = vmatmul.mubr.bf16.gmra.mrb[0].mxu0 %v97
    %v140 = vpop.f32.mrb[0].mxu0
    %v141 = vadd.f32 %v83, %v140
    %v142 = vpop.f32.mrb[0].mxu0
    %v143 = vadd.f32 %v87, %v142
    %v144 = vpop.f32.mrb[0].mxu0
    %v145 = vpop.f32.mrb[0].mxu0
    %146 = vdwg.mxu0
    %v147 = vmax.f32 %v141, 0.0
    %v148 = vmax.f32 %v143, 0.0
    %v149 = vpack.c.bf16 %v147, %v147
    %v150 = vpack.c.bf16 %v148, %v148
    %v151 = vld [vmem:[#allocation4] sm:$0xff]
    %v152 = vld [vmem:[#allocation4 + $0x8] sm:$0xff]
    %v153 = vld [vmem:[#allocation4 + $0x10] sm:$0xff]
    %v154 = vld [vmem:[#allocation4 + $0x18] sm:$0xff]
    %v155 = vld [vmem:[#allocation4 + $0x20] sm:$0xff]
    %v156 = vld [vmem:[#allocation4 + $0x28] sm:$0xff]
    %v157 = vld [vmem:[#allocation4 + $0x30] sm:$0xff]
    %v158 = vld [vmem:[#allocation4 + $0x38] sm:$0xff]
    %v159 = vld [vmem:[#allocation4 + $0x40] sm:$0xff]
    %v160 = vld [vmem:[#allocation4 + $0x48] sm:$0xff]
    %v161 = vld [vmem:[#allocation4 + $0x50] sm:$0xff]
    %v162 = vld [vmem:[#allocation4 + $0x58] sm:$0xff]
    %v163 = vld [vmem:[#allocation4 + $0x60] sm:$0xff]
    %v164 = vld [vmem:[#allocation4 + $0x68] sm:$0xff]
    %v165 = vld [vmem:[#allocation4 + $0x70] sm:$0xff]
    %v166 = vld [vmem:[#allocation4 + $0x78] sm:$0xff]
    %v167 = vld [vmem:[#allocation4 + $0x80] sm:$0xff]
    %v168 = vld [vmem:[#allocation4 + $0x88] sm:$0xff]
    %v169 = vld [vmem:[#allocation4 + $0x90] sm:$0xff]
    %v170 = vld [vmem:[#allocation4 + $0x98] sm:$0xff]
    %v171 = vld [vmem:[#allocation4 + $0xa0] sm:$0xff]
    %v172 = vld [vmem:[#allocation4 + $0xa8] sm:$0xff]
    %v173 = vld [vmem:[#allocation4 + $0xb0] sm:$0xff]
    %v174 = vld [vmem:[#allocation4 + $0xb8] sm:$0xff]
    %v175 = vld [vmem:[#allocation4 + $0xc0] sm:$0xff]
    %v176 = vld [vmem:[#allocation4 + $0xc8] sm:$0xff]
    %v177 = vld [vmem:[#allocation4 + $0xd0] sm:$0xff]
    %v178 = vld [vmem:[#allocation4 + $0xd8] sm:$0xff]
    %v179 = vld [vmem:[#allocation4 + $0xe0] sm:$0xff]
    %v180 = vld [vmem:[#allocation4 + $0xe8] sm:$0xff]
    %v181 = vld [vmem:[#allocation4 + $0xf0] sm:$0xff]
    %v182 = vld [vmem:[#allocation4 + $0xf8] sm:$0xff]
    %v183 = vld [vmem:[%s4] sm:$0x3]
    %v185 = vlaneseq
    %v186 = vshrl.u32 %v185, 7
    %v187 = vsub.s32 0, %v186
    %v188 = vrot.slane %v183, %v187
    %v189 = vlaneseq
    %v190 = vshrl.u32 %v189, 7
    %v191 = vsub.s32 1, %v190
    %v192 = vrot.slane %v183, %v191
    %v227 = vunpack.c.l.b16 %v151
    %v228 = vunpack.c.h.b16 %v151
    %v229 = vunpack.c.l.b16 %v152
    %v230 = vunpack.c.h.b16 %v152
    %v231 = vunpack.c.l.b16 %v153
    %v232 = vunpack.c.h.b16 %v153
    %v233 = vunpack.c.l.b16 %v154
    %v234 = vunpack.c.h.b16 %v154
    %v235 = vunpack.c.l.b16 %v155
    %v236 = vunpack.c.h.b16 %v155
    %v237 = vunpack.c.l.b16 %v156
    %v238 = vunpack.c.h.b16 %v156
    %v239 = vunpack.c.l.b16 %v157
    %v240 = vunpack.c.h.b16 %v157
    %v241 = vunpack.c.l.b16 %v158
    %v242 = vunpack.c.h.b16 %v158
    %v243 = vunpack.c.l.b16 %v159
    %v244 = vunpack.c.h.b16 %v159
    %v245 = vunpack.c.l.b16 %v160
    %v246 = vunpack.c.h.b16 %v160
    %v247 = vunpack.c.l.b16 %v161
    %v248 = vunpack.c.h.b16 %v161
    %v249 = vunpack.c.l.b16 %v162
    %v250 = vunpack.c.h.b16 %v162
    %v251 = vunpack.c.l.b16 %v163
    %v252 = vunpack.c.h.b16 %v163
    %v253 = vunpack.c.l.b16 %v164
    %v254 = vunpack.c.h.b16 %v164
    %v255 = vunpack.c.l.b16 %v165
    %v256 = vunpack.c.h.b16 %v165
    %v257 = vunpack.c.l.b16 %v166
    %v258 = vunpack.c.h.b16 %v166
    %v259 = vunpack.c.l.b16 %v167
    %v260 = vunpack.c.h.b16 %v167
    %v261 = vunpack.c.l.b16 %v168
    %v262 = vunpack.c.h.b16 %v168
    %v263 = vunpack.c.l.b16 %v169
    %v264 = vunpack.c.h.b16 %v169
    %v265 = vunpack.c.l.b16 %v170
    %v266 = vunpack.c.h.b16 %v170
    %v267 = vunpack.c.l.b16 %v171
    %v268 = vunpack.c.h.b16 %v171
    %v269 = vunpack.c.l.b16 %v172
    %v270 = vunpack.c.h.b16 %v172
    %v271 = vunpack.c.l.b16 %v173
    %v272 = vunpack.c.h.b16 %v173
    %v273 = vunpack.c.l.b16 %v174
    %v274 = vunpack.c.h.b16 %v174
    %v275 = vunpack.c.l.b16 %v175
    %v276 = vunpack.c.h.b16 %v175
    %v277 = vunpack.c.l.b16 %v176
    %v278 = vunpack.c.h.b16 %v176
    %v279 = vunpack.c.l.b16 %v177
    %v280 = vunpack.c.h.b16 %v177
    %v281 = vunpack.c.l.b16 %v178
    %v282 = vunpack.c.h.b16 %v178
    %v283 = vunpack.c.l.b16 %v179
    %v284 = vunpack.c.h.b16 %v179
    %v285 = vunpack.c.l.b16 %v180
    %v286 = vunpack.c.h.b16 %v180
    %v287 = vunpack.c.l.b16 %v181
    %v288 = vunpack.c.h.b16 %v181
    %v289 = vunpack.c.l.b16 %v182
    %v290 = vunpack.c.h.b16 %v182
    %v291 = vpack.c.b16 %v229, %v227
    %v292 = vpack.c.b16 %v230, %v228
    %v293 = vpack.c.b16 %v233, %v231
    %v294 = vpack.c.b16 %v234, %v232
    %v295 = vpack.c.b16 %v237, %v235
    %v296 = vpack.c.b16 %v238, %v236
    %v297 = vpack.c.b16 %v241, %v239
    %v298 = vpack.c.b16 %v242, %v240
    %v299 = vpack.c.b16 %v245, %v243
    %v300 = vpack.c.b16 %v246, %v244
    %v301 = vpack.c.b16 %v249, %v247
    %v302 = vpack.c.b16 %v250, %v248
    %v303 = vpack.c.b16 %v253, %v251
    %v304 = vpack.c.b16 %v254, %v252
    %v305 = vpack.c.b16 %v257, %v255
    %v306 = vpack.c.b16 %v258, %v256
    %v307 = vpack.c.b16 %v261, %v259
    %v308 = vpack.c.b16 %v262, %v260
    %v309 = vpack.c.b16 %v265, %v263
    %v310 = vpack.c.b16 %v266, %v264
    %v311 = vpack.c.b16 %v269, %v267
    %v312 = vpack.c.b16 %v270, %v268
    %v313 = vpack.c.b16 %v273, %v271
    %v314 = vpack.c.b16 %v274, %v272
    %v315 = vpack.c.b16 %v277, %v275
    %v316 = vpack.c.b16 %v278, %v276
    %v317 = vpack.c.b16 %v281, %v279
    %v318 = vpack.c.b16 %v282, %v280
    %v319 = vpack.c.b16 %v285, %v283
    %v320 = vpack.c.b16 %v286, %v284
    %v321 = vpack.c.b16 %v289, %v287
    %v322 = vpack.c.b16 %v290, %v288
    %355 = vmatprep.subr.bf16.mxu0 %v292
    %356 = vmatpush1.bf16.msra.mxu0 %v291
    %357 = vmatprep.subr.bf16.mxu0 %v294
    %358 = vmatpush1.bf16.msra.mxu0 %v293
    %359 = vmatprep.subr.bf16.mxu0 %v296
    %360 = vmatpush1.bf16.msra.mxu0 %v295
    %361 = vmatprep.subr.bf16.mxu0 %v298
    %362 = vmatpush1.bf16.msra.mxu0 %v297
    %363 = vmatprep.subr.bf16.mxu0 %v300
    %364 = vmatpush1.bf16.msra.mxu0 %v299
    %365 = vmatprep.subr.bf16.mxu0 %v302
    %366 = vmatpush1.bf16.msra.mxu0 %v301
    %367 = vmatprep.subr.bf16.mxu0 %v304
    %368 = vmatpush1.bf16.msra.mxu0 %v303
    %369 = vmatprep.subr.bf16.mxu0 %v306
    %370 = vmatpush1.bf16.msra.mxu0 %v305
    %371 = vmatprep.subr.bf16.mxu0 %v308
    %372 = vmatpush1.bf16.msra.mxu0 %v307
    %373 = vmatprep.subr.bf16.mxu0 %v310
    %374 = vmatpush1.bf16.msra.mxu0 %v309
    %375 = vmatprep.subr.bf16.mxu0 %v312
    %376 = vmatpush1.bf16.msra.mxu0 %v311
    %377 = vmatprep.subr.bf16.mxu0 %v314
    %378 = vmatpush1.bf16.msra.mxu0 %v313
    %379 = vmatprep.subr.bf16.mxu0 %v316
    %380 = vmatpush1.bf16.msra.mxu0 %v315
    %381 = vmatprep.subr.bf16.mxu0 %v318
    %382 = vmatpush1.bf16.msra.mxu0 %v317
    %383 = vmatprep.subr.bf16.mxu0 %v320
    %384 = vmatpush1.bf16.msra.mxu0 %v319
    %385 = vmatprep.subr.bf16.mxu0 %v322
    %386 = vmatpush1.bf16.msra.mxu0 %v321
    %387 = vmatprep.mubr.bf16.mxu0 %v150
    %388 = vmatmul.mubr.bf16.gmra.mrb[0].mxu0 %v149
    %v389 = vpop.f32.mrb[0].mxu0
    %v390 = vadd.f32 %v188, %v389
    %v391 = vpop.f32.mrb[0].mxu0
    %v392 = vadd.f32 %v192, %v391
    %v393 = vpop.f32.mrb[0].mxu0
    %v394 = vpop.f32.mrb[0].mxu0
    %395 = vdwg.mxu0
    %v396 = vmax.f32 %v390, 0.0
    %v397 = vmax.f32 %v392, 0.0
    %v398 = vld [vmem:[%s5] sm:$0x3]
    %v400 = vlaneseq
    %v401 = vshrl.u32 %v400, 7
    %v402 = vsub.s32 0, %v401
    %v403 = vrot.slane %v398, %v402
    %v404 = vlaneseq
    %v405 = vshrl.u32 %v404, 7
    %v406 = vsub.s32 1, %v405
    %v407 = vrot.slane %v398, %v406
    %v410 = vmul.f32 %v396, %v403
    %v411 = vmul.f32 %v397, %v407
    %v412 = vadd.f32 %v410, %v411
    %413 = vadd.xlane.f32.xlu0 %v412
    %v414 = vpop.xlane.xlu0 %413
    %s415 = sld [smem:[#allocation2]]
    %v416 = vstv %s415
    %v417 = vadd.f32 %v414, %v416
    %v418 = vld [vmem:[%s7] sm:$0xff]
    %v419 = vld [vmem:[%s8] sm:$0x3]
    %v421 = vlaneseq
    %v422 = vshrl.u32 %v421, 7
    %v423 = vsub.s32 0, %v422
    %v424 = vrot.slane %v419, %v423
    %v425 = vlaneseq
    %v426 = vshrl.u32 %v425, 7
    %v427 = vsub.s32 1, %v426
    %v428 = vrot.slane %v419, %v427
    %v432 = vunpack.c.l.b16 %v418
    %v433 = vunpack.c.h.b16 %v418
    %v434 = vpack.c.b16 %v432, %v432
    %v435 = vpack.c.b16 %v433, %v433
    %v437 = vsel %vm99, %v434, 0
    %v440 = vsel %vm99, %v435, 0
    %442 = vmatprep.subr.bf16.mxu0 %v440
    %443 = vmatpush1.bf16.msra.mxu0 %v437
    %444 = vmatprep.subr.bf16.mxu0 0
    %445 = vmatpush1.bf16.msra.mxu0 0
    %446 = vmatprep.subr.bf16.mxu0 0
    %447 = vmatpush1.bf16.msra.mxu0 0
    %448 = vmatprep.subr.bf16.mxu0 0
    %449 = vmatpush1.bf16.msra.mxu0 0
    %450 = vmatprep.subr.bf16.mxu0 0
    %451 = vmatpush1.bf16.msra.mxu0 0
    %452 = vmatprep.subr.bf16.mxu0 0
    %453 = vmatpush1.bf16.msra.mxu0 0
    %454 = vmatprep.subr.bf16.mxu0 0
    %455 = vmatpush1.bf16.msra.mxu0 0
    %456 = vmatprep.subr.bf16.mxu0 0
    %457 = vmatpush1.bf16.msra.mxu0 0
    %458 = vmatprep.subr.bf16.mxu0 0
    %459 = vmatpush1.bf16.msra.mxu0 0
    %460 = vmatprep.subr.bf16.mxu0 0
    %461 = vmatpush1.bf16.msra.mxu0 0
    %462 = vmatprep.subr.bf16.mxu0 0
    %463 = vmatpush1.bf16.msra.mxu0 0
    %464 = vmatprep.subr.bf16.mxu0 0
    %465 = vmatpush1.bf16.msra.mxu0 0
    %466 = vmatprep.subr.bf16.mxu0 0
    %467 = vmatpush1.bf16.msra.mxu0 0
    %468 = vmatprep.subr.bf16.mxu0 0
    %469 = vmatpush1.bf16.msra.mxu0 0
    %470 = vmatprep.subr.bf16.mxu0 0
    %471 = vmatpush1.bf16.msra.mxu0 0
    %472 = vmatprep.subr.bf16.mxu0 0
    %473 = vmatpush1.bf16.msra.mxu0 0
    %474 = vmatprep.mubr.bf16.mxu0 0
    %475 = vmatmul.mubr.bf16.gmra.mrb[0].mxu0 %v97
    %v476 = vpop.f32.mrb[0].mxu0
    %v477 = vadd.f32 %v424, %v476
    %v478 = vpop.f32.mrb[0].mxu0
    %v479 = vadd.f32 %v428, %v478
    %v480 = vpop.f32.mrb[0].mxu0
    %v481 = vpop.f32.mrb[0].mxu0
    %482 = vdwg.mxu0
    %v483 = vmax.f32 %v477, 0.0
    %v484 = vmax.f32 %v479, 0.0
    %v485 = vpack.c.bf16 %v483, %v483
    %v486 = vpack.c.bf16 %v484, %v484
    %v487 = vld [vmem:[#allocation6] sm:$0xff]
    %v488 = vld [vmem:[#allocation6 + $0x8] sm:$0xff]
    %v489 = vld [vmem:[#allocation6 + $0x10] sm:$0xff]
    %v490 = vld [vmem:[#allocation6 + $0x18] sm:$0xff]
    %v491 = vld [vmem:[#allocation6 + $0x20] sm:$0xff]
    %v492 = vld [vmem:[#allocation6 + $0x28] sm:$0xff]
    %v493 = vld [vmem:[#allocation6 + $0x30] sm:$0xff]
    %v494 = vld [vmem:[#allocation6 + $0x38] sm:$0xff]
    %v495 = vld [vmem:[#allocation6 + $0x40] sm:$0xff]
    %v496 = vld [vmem:[#allocation6 + $0x48] sm:$0xff]
    %v497 = vld [vmem:[#allocation6 + $0x50] sm:$0xff]
    %v498 = vld [vmem:[#allocation6 + $0x58] sm:$0xff]
    %v499 = vld [vmem:[#allocation6 + $0x60] sm:$0xff]
    %v500 = vld [vmem:[#allocation6 + $0x68] sm:$0xff]
    %v501 = vld [vmem:[#allocation6 + $0x70] sm:$0xff]
    %v502 = vld [vmem:[#allocation6 + $0x78] sm:$0xff]
    %v503 = vld [vmem:[#allocation6 + $0x80] sm:$0xff]
    %v504 = vld [vmem:[#allocation6 + $0x88] sm:$0xff]
    %v505 = vld [vmem:[#allocation6 + $0x90] sm:$0xff]
    %v506 = vld [vmem:[#allocation6 + $0x98] sm:$0xff]
    %v507 = vld [vmem:[#allocation6 + $0xa0] sm:$0xff]
    %v508 = vld [vmem:[#allocation6 + $0xa8] sm:$0xff]
    %v509 = vld [vmem:[#allocation6 + $0xb0] sm:$0xff]
    %v510 = vld [vmem:[#allocation6 + $0xb8] sm:$0xff]
    %v511 = vld [vmem:[#allocation6 + $0xc0] sm:$0xff]
    %v512 = vld [vmem:[#allocation6 + $0xc8] sm:$0xff]
    %v513 = vld [vmem:[#allocation6 + $0xd0] sm:$0xff]
    %v514 = vld [vmem:[#allocation6 + $0xd8] sm:$0xff]
    %v515 = vld [vmem:[#allocation6 + $0xe0] sm:$0xff]
    %v516 = vld [vmem:[#allocation6 + $0xe8] sm:$0xff]
    %v517 = vld [vmem:[#allocation6 + $0xf0] sm:$0xff]
    %v518 = vld [vmem:[#allocation6 + $0xf8] sm:$0xff]
    %v519 = vld [vmem:[%s10] sm:$0x3]
    %v521 = vlaneseq
    %v522 = vshrl.u32 %v521, 7
    %v523 = vsub.s32 0, %v522
    %v524 = vrot.slane %v519, %v523
    %v525 = vlaneseq
    %v526 = vshrl.u32 %v525, 7
    %v527 = vsub.s32 1, %v526
    %v528 = vrot.slane %v519, %v527
    %v563 = vunpack.c.l.b16 %v487
    %v564 = vunpack.c.h.b16 %v487
    %v565 = vunpack.c.l.b16 %v488
    %v566 = vunpack.c.h.b16 %v488
    %v567 = vunpack.c.l.b16 %v489
    %v568 = vunpack.c.h.b16 %v489
    %v569 = vunpack.c.l.b16 %v490
    %v570 = vunpack.c.h.b16 %v490
    %v571 = vunpack.c.l.b16 %v491
    %v572 = vunpack.c.h.b16 %v491
    %v573 = vunpack.c.l.b16 %v492
    %v574 = vunpack.c.h.b16 %v492
    %v575 = vunpack.c.l.b16 %v493
    %v576 = vunpack.c.h.b16 %v493
    %v577 = vunpack.c.l.b16 %v494
    %v578 = vunpack.c.h.b16 %v494
    %v579 = vunpack.c.l.b16 %v495
    %v580 = vunpack.c.h.b16 %v495
    %v581 = vunpack.c.l.b16 %v496
    %v582 = vunpack.c.h.b16 %v496
    %v583 = vunpack.c.l.b16 %v497
    %v584 = vunpack.c.h.b16 %v497
    %v585 = vunpack.c.l.b16 %v498
    %v586 = vunpack.c.h.b16 %v498
    %v587 = vunpack.c.l.b16 %v499
    %v588 = vunpack.c.h.b16 %v499
    %v589 = vunpack.c.l.b16 %v500
    %v590 = vunpack.c.h.b16 %v500
    %v591 = vunpack.c.l.b16 %v501
    %v592 = vunpack.c.h.b16 %v501
    %v593 = vunpack.c.l.b16 %v502
    %v594 = vunpack.c.h.b16 %v502
    %v595 = vunpack.c.l.b16 %v503
    %v596 = vunpack.c.h.b16 %v503
    %v597 = vunpack.c.l.b16 %v504
    %v598 = vunpack.c.h.b16 %v504
    %v599 = vunpack.c.l.b16 %v505
    %v600 = vunpack.c.h.b16 %v505
    %v601 = vunpack.c.l.b16 %v506
    %v602 = vunpack.c.h.b16 %v506
    %v603 = vunpack.c.l.b16 %v507
    %v604 = vunpack.c.h.b16 %v507
    %v605 = vunpack.c.l.b16 %v508
    %v606 = vunpack.c.h.b16 %v508
    %v607 = vunpack.c.l.b16 %v509
    %v608 = vunpack.c.h.b16 %v509
    %v609 = vunpack.c.l.b16 %v510
    %v610 = vunpack.c.h.b16 %v510
    %v611 = vunpack.c.l.b16 %v511
    %v612 = vunpack.c.h.b16 %v511
    %v613 = vunpack.c.l.b16 %v512
    %v614 = vunpack.c.h.b16 %v512
    %v615 = vunpack.c.l.b16 %v513
    %v616 = vunpack.c.h.b16 %v513
    %v617 = vunpack.c.l.b16 %v514
    %v618 = vunpack.c.h.b16 %v514
    %v619 = vunpack.c.l.b16 %v515
    %v620 = vunpack.c.h.b16 %v515
    %v621 = vunpack.c.l.b16 %v516
    %v622 = vunpack.c.h.b16 %v516
    %v623 = vunpack.c.l.b16 %v517
    %v624 = vunpack.c.h.b16 %v517
    %v625 = vunpack.c.l.b16 %v518
    %v626 = vunpack.c.h.b16 %v518
    %v627 = vpack.c.b16 %v565, %v563
    %v628 = vpack.c.b16 %v566, %v564
    %v629 = vpack.c.b16 %v569, %v567
    %v630 = vpack.c.b16 %v570, %v568
    %v631 = vpack.c.b16 %v573, %v571
    %v632 = vpack.c.b16 %v574, %v572
    %v633 = vpack.c.b16 %v577, %v575
    %v634 = vpack.c.b16 %v578, %v576
    %v635 = vpack.c.b16 %v581, %v579
    %v636 = vpack.c.b16 %v582, %v580
    %v637 = vpack.c.b16 %v585, %v583
    %v638 = vpack.c.b16 %v586, %v584
    %v639 = vpack.c.b16 %v589, %v587
    %v640 = vpack.c.b16 %v590, %v588
    %v641 = vpack.c.b16 %v593, %v591
    %v642 = vpack.c.b16 %v594, %v592
    %v643 = vpack.c.b16 %v597, %v595
    %v644 = vpack.c.b16 %v598, %v596
    %v645 = vpack.c.b16 %v601, %v599
    %v646 = vpack.c.b16 %v602, %v600
    %v647 = vpack.c.b16 %v605, %v603
    %v648 = vpack.c.b16 %v606, %v604
    %v649 = vpack.c.b16 %v609, %v607
    %v650 = vpack.c.b16 %v610, %v608
    %v651 = vpack.c.b16 %v613, %v611
    %v652 = vpack.c.b16 %v614, %v612
    %v653 = vpack.c.b16 %v617, %v615
    %v654 = vpack.c.b16 %v618, %v616
    %v655 = vpack.c.b16 %v621, %v619
    %v656 = vpack.c.b16 %v622, %v620
    %v657 = vpack.c.b16 %v625, %v623
    %v658 = vpack.c.b16 %v626, %v624
    %691 = vmatprep.subr.bf16.mxu0 %v628
    %692 = vmatpush1.bf16.msra.mxu0 %v627
    %693 = vmatprep.subr.bf16.mxu0 %v630
    %694 = vmatpush1.bf16.msra.mxu0 %v629
    %695 = vmatprep.subr.bf16.mxu0 %v632
    %696 = vmatpush1.bf16.msra.mxu0 %v631
    %697 = vmatprep.subr.bf16.mxu0 %v634
    %698 = vmatpush1.bf16.msra.mxu0 %v633
    %699 = vmatprep.subr.bf16.mxu0 %v636
    %700 = vmatpush1.bf16.msra.mxu0 %v635
    %701 = vmatprep.subr.bf16.mxu0 %v638
    %702 = vmatpush1.bf16.msra.mxu0 %v637
    %703 = vmatprep.subr.bf16.mxu0 %v640
    %704 = vmatpush1.bf16.msra.mxu0 %v639
    %705 = vmatprep.subr.bf16.mxu0 %v642
    %706 = vmatpush1.bf16.msra.mxu0 %v641
    %707 = vmatprep.subr.bf16.mxu0 %v644
    %708 = vmatpush1.bf16.msra.mxu0 %v643
    %709 = vmatprep.subr.bf16.mxu0 %v646
    %710 = vmatpush1.bf16.msra.mxu0 %v645
    %711 = vmatprep.subr.bf16.mxu0 %v648
    %712 = vmatpush1.bf16.msra.mxu0 %v647
    %713 = vmatprep.subr.bf16.mxu0 %v650
    %714 = vmatpush1.bf16.msra.mxu0 %v649
    %715 = vmatprep.subr.bf16.mxu0 %v652
    %716 = vmatpush1.bf16.msra.mxu0 %v651
    %717 = vmatprep.subr.bf16.mxu0 %v654
    %718 = vmatpush1.bf16.msra.mxu0 %v653
    %719 = vmatprep.subr.bf16.mxu0 %v656
    %720 = vmatpush1.bf16.msra.mxu0 %v655
    %721 = vmatprep.subr.bf16.mxu0 %v658
    %722 = vmatpush1.bf16.msra.mxu0 %v657
    %723 = vmatprep.mubr.bf16.mxu0 %v486
    %724 = vmatmul.mubr.bf16.gmra.mrb[0].mxu0 %v485
    %v725 = vpop.f32.mrb[0].mxu0
    %v726 = vadd.f32 %v524, %v725
    %v727 = vpop.f32.mrb[0].mxu0
    %v728 = vadd.f32 %v528, %v727
    %v729 = vpop.f32.mrb[0].mxu0
    %v730 = vpop.f32.mrb[0].mxu0
    %731 = vdwg.mxu0
    %v732 = vmax.f32 %v726, 0.0
    %v733 = vmax.f32 %v728, 0.0
    %v734 = vld [vmem:[%s11] sm:$0x3]
    %v736 = vlaneseq
    %v737 = vshrl.u32 %v736, 7
    %v738 = vsub.s32 0, %v737
    %v739 = vrot.slane %v734, %v738
    %v740 = vlaneseq
    %v741 = vshrl.u32 %v740, 7
    %v742 = vsub.s32 1, %v741
    %v743 = vrot.slane %v734, %v742
    %v746 = vmul.f32 %v732, %v739
    %v747 = vmul.f32 %v733, %v743
    %v748 = vadd.f32 %v746, %v747
    %749 = vadd.xlane.f32.xlu0 %v748
    %v750 = vpop.xlane.xlu0 %749
    %s751 = sld [smem:[#allocation3]]
    %v752 = vstv %s751
    %v753 = vadd.f32 %v750, %v752
    %vm754 = vcmask 7168
    %v755 = vsel %vm754, %v417, %v753
    %vm756 = vcmask 15360
    %757 = vst.msk [vmem:[%s13] sm:$0xff] %vm756, %v755
    // Predicated region
    $region62: #{critic_forward.1} parent=1 // pred_check
      _
    $region63: #{critic_forward.1} parent=1 // pred_check_branch
      %759 = sbr.rel (0) target = $region65
    $region64: #{critic_forward.1} parent=1 // pred_region
      _
    $region65: #{critic_forward.1} parent=1 // pred_fallthru
      _
    // Predicated region
    $region66: #{critic_forward.1} parent=1 // pred_check
      _
    $region67: #{critic_forward.1} parent=1 // pred_check_branch
      %761 = sbr.rel (0) target = $region69
    $region68: #{critic_forward.1} parent=1 // pred_region
      _
    $region69: #{critic_forward.1} parent=1 // pred_fallthru
      _
    %762 = vsyncpa [#allocation5], 1
    %763 = vsyncpa [#allocation7], 1

</llo_original>
